<compile_context>
chip_gen: v7x
topology: tpu7x:2x2x1
jax: 0.10.0
libtpu: 0.0.40
codegen_flags: <defaults>
</compile_context>

<pallas_src>
import functools

import jax
import jax.numpy as jnp
from jax.experimental import pallas as pl
from jax.experimental.pallas import tpu as pltpu

LANE = 128
SUBLANE = 8


def _round_up(x: int, m: int) -> int:
    return ((x + m - 1) // m) * m


def _net_tanh_kernel(x_ref, w1_ref, b1_ref, w2_ref, b2_ref, o_ref):
    # hidden = tanh(x @ W1^T + b1); W1 is pre-transposed to (D_in, H_p).
    # x tile is cast to the weight dtype (bf16 path -> native-rate MXU); the
    # accumulate and tanh/bias math stay in f32.
    x = x_ref[...].astype(w1_ref.dtype)
    h = jnp.dot(x, w1_ref[...], preferred_element_type=jnp.float32)
    h = jnp.tanh(h + b1_ref[...])                         # (tb,H_p)+(1,H_p), f32 EUP tanh
    # out = hidden @ W2^T + b2
    out = jnp.dot(h.astype(w2_ref.dtype), w2_ref[...],
                  preferred_element_type=jnp.float32)
    o_ref[...] = (out + b2_ref[...]).astype(o_ref.dtype)


def prepare_params(w1, b1, w2, b2, weight_dtype=jnp.float32):
    """One-time prep: transpose weights, zero-pad ONLY the lane dims H and D_out
    to multiples of 128.  D_in (the contraction dim) is left unpadded.

    w1: (H, D_in), b1: (H,), w2: (D_out, H), b2: (D_out,)   (PyTorch layout)
    Returns (w1_t, b1_p, w2_t, b2_p, D_out).  Padding is exact: padded hidden
    columns are tanh(0)=0 and hit zero rows of W2^T; padded output columns are
    sliced off in the wrapper.  Biases stay f32 (tanh/bias math is f32).
    """
    H, D_in = w1.shape
    D_out = w2.shape[0]
    H_p = _round_up(H, LANE)
    D_out_p = _round_up(D_out, LANE)   # keep at 128 for MNIST; do NOT over-pad

    w1_t = jnp.zeros((D_in, H_p), weight_dtype).at[:, :H].set(w1.T.astype(weight_dtype))
    b1_p = jnp.zeros((1, H_p), jnp.float32).at[0, :H].set(b1.astype(jnp.float32))
    w2_t = jnp.zeros((H_p, D_out_p), weight_dtype).at[:H, :D_out].set(w2.T.astype(weight_dtype))
    b2_p = jnp.zeros((1, D_out_p), jnp.float32).at[0, :D_out].set(b2.astype(jnp.float32))
    return w1_t, b1_p, w2_t, b2_p, D_out


@functools.partial(jax.jit, static_argnames=("d_out", "tile_b", "out_dtype"))
def net_tanh_forward(x, w1_t, b1_p, w2_t, b2_p, *, d_out, tile_b=512, out_dtype=None):
    """x: (B, D_in).  w1_t/b1_p/w2_t/b2_p from prepare_params.  d_out is static."""
    B, D_in = x.shape
    D_in_w, H_p = w1_t.shape
    assert D_in_w == D_in, "x feature dim does not match prepared W1"
    D_out_p = w2_t.shape[1]
    out_dtype = x.dtype if out_dtype is None else jnp.dtype(out_dtype)

    # --- batch tiling --------------------------------------------------------
    # B <= 256: one full-extent block (block dim == array dim -> no (8,128)
    #           divisibility constraint, no padding, no copy).
    # B  > 256: 128-aligned tile, capped at ceil(B/2) so there are always >= 2
    #           grid steps ("parallel" axis can use both v7x TensorCores).
    if B <= 2 * LANE:
        tb = B
    else:
        tb = max(LANE, min(_round_up(tile_b, LANE), _round_up(pl.cdiv(B, 2), LANE)))
    grid = (pl.cdiv(B, tb),)
    # NOTE: when tb does not divide B, the last block's out-of-bounds rows are
    # garbage on read; they only influence the matching out-of-bounds output
    # rows, which Pallas never writes back.  They must never feed a reduction.

    x_item = jnp.dtype(x.dtype).itemsize
    w_item = jnp.dtype(w1_t.dtype).itemsize
    o_item = jnp.dtype(out_dtype).itemsize
    weight_bytes = (w1_t.size + w2_t.size) * w_item + (b1_p.size + b2_p.size) * 4

    cost = pl.CostEstimate(
        flops=2 * B * (D_in * H_p + H_p * D_out_p),
        transcendentals=B * H_p,
        bytes_accessed=B * D_in * x_item + weight_bytes + B * D_out_p * o_item,
    )

    # VMEM budget: double-buffered x/out streams + (double-buffered) resident
    # weights + f32 hidden temp + in-kernel x cast.  Capped at 64 MiB so the
    # same setting is valid on v7x (64 MiB/TC).
    budget = (2 * tb * D_in * x_item + 2 * tb * D_out_p * o_item
              + 2 * weight_bytes + tb * H_p * 4 + tb * D_in * w_item)
    vmem_limit = int(min(max(2 * budget, 32 << 20), 64 << 20))

    out = pl.pallas_call(
        _net_tanh_kernel,
        out_shape=jax.ShapeDtypeStruct((B, D_out_p), out_dtype),
        grid_spec=pltpu.PrefetchScalarGridSpec(
            num_scalar_prefetch=0,
            grid=grid,
            in_specs=[
                pl.BlockSpec((tb, D_in), lambda i: (i, 0)),      # streamed x tiles
                pl.BlockSpec((D_in, H_p), lambda i: (0, 0)),     # W1^T, VMEM-resident
                pl.BlockSpec((1, H_p), lambda i: (0, 0)),        # b1,   VMEM-resident
                pl.BlockSpec((H_p, D_out_p), lambda i: (0, 0)),  # W2^T, VMEM-resident
                pl.BlockSpec((1, D_out_p), lambda i: (0, 0)),    # b2,   VMEM-resident
            ],
            out_specs=pl.BlockSpec((tb, D_out_p), lambda i: (i, 0)),
        ),
        compiler_params=pltpu.CompilerParams(
            dimension_semantics=("parallel",),   # shard batch steps across TCs (v7x)
            vmem_limit_bytes=vmem_limit,
        ),
        cost_estimate=cost,
    )(x, w1_t, b1_p, w2_t, b2_p)

    return out[:, :d_out]


def init_params(key, D_in, H, D_out, dtype=jnp.float32):
    """Deterministic init mimicking nn.Linear's U(-1/sqrt(fan_in), 1/sqrt(fan_in))."""
    k1, k2, k3, k4 = jax.random.split(key, 4)
    lim1 = 1.0 / jnp.sqrt(jnp.asarray(D_in, dtype))
    lim2 = 1.0 / jnp.sqrt(jnp.asarray(H, dtype))
    w1 = jax.random.uniform(k1, (H, D_in), dtype, -lim1, lim1)
    b1 = jax.random.uniform(k2, (H,), dtype, -lim1, lim1)
    w2 = jax.random.uniform(k3, (D_out, H), dtype, -lim2, lim2)
    b2 = jax.random.uniform(k4, (D_out,), dtype, -lim2, lim2)
    return w1, b1, w2, b2


if __name__ == "__main__":
    # Small shapes consistent with the module's forward: flat features -> logits.
    B, D_in, H, D_out = 32, 64, 32, 10

    key = jax.random.PRNGKey(0)
    kx, kp = jax.random.split(key)
    x = jax.random.normal(kx, (B, D_in), jnp.float32)
    w1, b1, w2, b2 = init_params(kp, D_in, H, D_out)

    # Pure-JAX reference (same semantics as the PyTorch forward).
    ref = jnp.tanh(x @ w1.T + b1) @ w2.T + b2

    # ---- f32 operand path (tight tolerance) --------------------------------
    w1_t, b1_p, w2_t, b2_p, d_out = prepare_params(w1, b1, w2, b2, jnp.float32)
    out = net_tanh_forward(x, w1_t, b1_p, w2_t, b2_p, d_out=d_out)
    jax.block_until_ready(out)
    assert out.shape == (B, D_out)
    assert jnp.allclose(out, ref, atol=2e-5, rtol=2e-5)

    # ---- bf16 operand path (f32 accumulate / f32 tanh+bias) ----------------
    w1_tb, b1_pb, w2_tb, b2_pb, _ = prepare_params(w1, b1, w2, b2, jnp.bfloat16)
    out_bf16 = net_tanh_forward(x, w1_tb, b1_pb, w2_tb, b2_pb, d_out=d_out)
    jax.block_until_ready(out_bf16)
    assert out_bf16.shape == (B, D_out)
    assert jnp.allclose(out_bf16, ref, atol=6e-2, rtol=6e-2)

    # ---- multi-step grid + ragged batch (no padded copy of x) --------------
    B2 = 272  # > 256 -> tb=256, 2 grid steps; 272 % 256 != 0 -> partial last block
    x2 = jax.random.normal(jax.random.PRNGKey(1), (B2, D_in), jnp.float32)
    out2 = net_tanh_forward(x2, w1_t, b1_p, w2_t, b2_p, d_out=d_out)
    jax.block_until_ready(out2)
    ref2 = jnp.tanh(x2 @ w1.T + b1) @ w2.T + b2
    assert out2.shape == (B2, D_out)
    assert jnp.allclose(out2, ref2, atol=2e-5, rtol=2e-5)

    print("KERNEL_OK")
</pallas_src>

<mosaic_0001>
module attributes {stable_mosaic.version = 11 : i64} {
  func.func @_net_tanh_kernel(%arg0: i32, %arg1: memref<32x64xf32, #tpu.memory_space<vmem>>, %arg2: memref<64x128xf32, #tpu.memory_space<vmem>>, %arg3: memref<1x128xf32, #tpu.memory_space<vmem>>, %arg4: memref<128x128xf32, #tpu.memory_space<vmem>>, %arg5: memref<1x128xf32, #tpu.memory_space<vmem>>, %arg6: memref<32x128xf32, #tpu.memory_space<vmem>>) attributes {dimension_semantics = [#tpu.dimension_semantics<parallel>], iteration_bounds = array<i64: 1>, scalar_prefetch = 0 : i64, scratch_operands = 0 : i64, tpu.core_type = #tpu.core_type<tc>, window_params = [{transform_indices = @transform_0, window_bounds = array<i64: 32, 64>}, {pipeline_mode = #tpu.pipeline_mode<synchronous>, transform_indices = @transform_1, window_bounds = array<i64: 64, 128>}, {pipeline_mode = #tpu.pipeline_mode<synchronous>, transform_indices = @transform_2, window_bounds = array<i64: 1, 128>}, {pipeline_mode = #tpu.pipeline_mode<synchronous>, transform_indices = @transform_3, window_bounds = array<i64: 128, 128>}, {pipeline_mode = #tpu.pipeline_mode<synchronous>, transform_indices = @transform_4, window_bounds = array<i64: 1, 128>}, {transform_indices = @transform_5, window_bounds = array<i64: 32, 128>}]} {
    %c0 = arith.constant 0 : index
    %c0_0 = arith.constant 0 : index
    %0 = vector.load %arg1[%c0, %c0_0] : memref<32x64xf32, #tpu.memory_space<vmem>>, vector<32x64xf32>
    %c0_1 = arith.constant 0 : index
    %c0_2 = arith.constant 0 : index
    %1 = vector.load %arg2[%c0_1, %c0_2] : memref<64x128xf32, #tpu.memory_space<vmem>>, vector<64x128xf32>
    %cst = arith.constant dense<0.000000e+00> : vector<32x128xf32>
    %2 = tpu.matmul %0, %1, %cst {dimension_numbers = #tpu.dot_dimension_numbers<[1], [0], [0], [1], [0, 0, 1, 1], [], []>} : vector<32x64xf32>, vector<64x128xf32>, vector<32x128xf32> -> vector<32x128xf32>
    %c0_3 = arith.constant 0 : index
    %c0_4 = arith.constant 0 : index
    %3 = vector.load %arg3[%c0_3, %c0_4] : memref<1x128xf32, #tpu.memory_space<vmem>>, vector<1x128xf32>
    %4 = vector.broadcast %3 : vector<1x128xf32> to vector<32x128xf32>
    %5 = arith.addf %2, %4 : vector<32x128xf32>
    %6 = math.tanh %5 : vector<32x128xf32>
    %c0_5 = arith.constant 0 : index
    %c0_6 = arith.constant 0 : index
    %7 = vector.load %arg4[%c0_5, %c0_6] : memref<128x128xf32, #tpu.memory_space<vmem>>, vector<128x128xf32>
    %cst_7 = arith.constant dense<0.000000e+00> : vector<32x128xf32>
    %8 = tpu.matmul %6, %7, %cst_7 {dimension_numbers = #tpu.dot_dimension_numbers<[1], [0], [0], [1], [0, 0, 1, 1], [], []>} : vector<32x128xf32>, vector<128x128xf32>, vector<32x128xf32> -> vector<32x128xf32>
    %c0_8 = arith.constant 0 : index
    %c0_9 = arith.constant 0 : index
    %9 = vector.load %arg5[%c0_8, %c0_9] : memref<1x128xf32, #tpu.memory_space<vmem>>, vector<1x128xf32>
    %10 = vector.broadcast %9 : vector<1x128xf32> to vector<32x128xf32>
    %11 = arith.addf %8, %10 : vector<32x128xf32>
    %c0_10 = arith.constant 0 : index
    %c0_11 = arith.constant 0 : index
    %12 = vector.load %arg6[%c0_10, %c0_11] : memref<32x128xf32, #tpu.memory_space<vmem>>, vector<32x128xf32>
    tpu.vector_store %arg6[%c0_10, %c0_11], %11 {strides = array<i32>} : memref<32x128xf32, #tpu.memory_space<vmem>>, vector<32x128xf32>,
    return
  }
  func.func @transform_0(%arg0: i32) -> (i32, i32) {
    %c0_i32 = arith.constant 0 : i32
    %c0_i32_0 = arith.constant 0 : i32
    return %arg0, %c0_i32 : i32, i32
  }
  func.func @transform_1(%arg0: i32) -> (i32, i32) {
    %c0_i32 = arith.constant 0 : i32
    %c0_i32_0 = arith.constant 0 : i32
    %c0_i32_1 = arith.constant 0 : i32
    return %c0_i32, %c0_i32_0 : i32, i32
  }
  func.func @transform_2(%arg0: i32) -> (i32, i32) {
    %c0_i32 = arith.constant 0 : i32
    %c0_i32_0 = arith.constant 0 : i32
    %c0_i32_1 = arith.constant 0 : i32
    return %c0_i32, %c0_i32_0 : i32, i32
  }
  func.func @transform_3(%arg0: i32) -> (i32, i32) {
    %c0_i32 = arith.constant 0 : i32
    %c0_i32_0 = arith.constant 0 : i32
    %c0_i32_1 = arith.constant 0 : i32
    return %c0_i32, %c0_i32_0 : i32, i32
  }
  func.func @transform_4(%arg0: i32) -> (i32, i32) {
    %c0_i32 = arith.constant 0 : i32
    %c0_i32_0 = arith.constant 0 : i32
    %c0_i32_1 = arith.constant 0 : i32
    return %c0_i32, %c0_i32_0 : i32, i32
  }
  func.func @transform_5(%arg0: i32) -> (i32, i32) {
    %c0_i32 = arith.constant 0 : i32
    %c0_i32_0 = arith.constant 0 : i32
    return %arg0, %c0_i32 : i32, i32
  }
}

</mosaic_0001>

<llo_original>
// kernel: net_tanh_forward.1
$region0: #{net_tanh_forward.1}
  #allocation0 [shape = 'u32[]', space=smem, size = 0x4, offset = 0x4, fixed_abs, tag = 'smem constant byte address 0x4 - core index']
  #allocation1 [shape = 'u32[144,128]{1,0:T(1,128)}', space=vmem, size = 0x12000, scoped, tag = 'internal scratch']
  %s0 = inlined_call_operand.hbm [shape: f32[32,64], index: 0, kind: input, shape index: {}]
  %s1 = inlined_call_operand.hbm [shape: f32[64,128], index: 1, kind: input, shape index: {}]
  %s2 = inlined_call_operand.vmem [shape: f32[1,128], index: 2, kind: input, shape index: {}]
  %s3 = inlined_call_operand.hbm [shape: f32[128,128], index: 3, kind: input, shape index: {}]
  %s4 = inlined_call_operand.vmem [shape: f32[1,128], index: 4, kind: input, shape index: {}]
  %s5 = inlined_call_operand.vmem [shape: f32[32,128], index: 5, kind: output, shape index: {}]
  %s6 = sld [smem:[#allocation0]]
  $region42: #{net_tanh_forward.1} parent=0
    _
  %s8 = ssub.s32 1, %s6
  %s9 = scalar_select 0, %s8, %s6
  $region1: #{net_tanh_forward.1} parent=0
    #allocation2 [shape = 'u8[16384]{0}', space=vmem, size = 0x4000, scoped, tag = 'input window, operand 0, single buffered']
    #allocation3 [shape = 's32[1]{0}', space=sflag, size = 0x4, scoped, tag = 'scoped memory for net_tanh_forward.1']
    #allocation4 [shape = 'u8[32768]{0}', space=vmem, size = 0x8000, scoped, tag = 'input window, operand 1, single buffered']
    #allocation5 [shape = 's32[1]{0}', space=sflag, size = 0x4, scoped, tag = 'scoped memory for net_tanh_forward.1']
    #allocation6 [shape = 'u8[65536]{0}', space=vmem, size = 0x10000, scoped, tag = 'input window, operand 3, single buffered']
    %10 = vsyncpa [#allocation3], 0
    %11 = vsyncpa [#allocation5], 0
    // Predicated region
    $region2: #{net_tanh_forward.1} parent=1 // pred_check
      _
    $region3: #{net_tanh_forward.1} parent=1 // pred_check_branch
      %13 = sbr.rel (0) target = $region5
    $region4: #{net_tanh_forward.1} parent=1 // pred_region
      %s15 = ssub.s32 512, 512
      %16 = vsyncadd [#allocation3], %s15
      %s17 = sshll.u32 [#allocation2], 4
      %s18 = int_to_ptr.vmem [resolvable:$true] %s17
      %23 = dma.hbm_to_vmem [thread:$0]  %s0, 512, %s18, [#allocation3], 128, 128, 8
    $region5: #{net_tanh_forward.1} parent=1 // pred_fallthru
      _
    // Predicated region
    $region6: #{net_tanh_forward.1} parent=1 // pred_check
      _
    $region7: #{net_tanh_forward.1} parent=1 // pred_check_branch
      %25 = sbr.rel (0) target = $region9
    $region8: #{net_tanh_forward.1} parent=1 // pred_region
      %s27 = ssub.s32 1024, 1024
      %28 = vsyncadd [#allocation5], %s27
      %s29 = sshll.u32 [#allocation4], 4
      %s30 = int_to_ptr.vmem [resolvable:$true] %s29
      %35 = dma.hbm_to_vmem [thread:$0]  %s1, 1024, %s30, [#allocation5], 128, 128, 8
    $region9: #{net_tanh_forward.1} parent=1 // pred_fallthru
      _
    // Predicated region
    $region10: #{net_tanh_forward.1} parent=1 // pred_check
      _
    $region11: #{net_tanh_forward.1} parent=1 // pred_check_branch
      %37 = sbr.rel (0) target = $region13
    $region12: #{net_tanh_forward.1} parent=1 // pred_region
      _
    $region13: #{net_tanh_forward.1} parent=1 // pred_fallthru
      _
    // Predicated region
    $region14: #{net_tanh_forward.1} parent=1 // pred_check
      _
    $region15: #{net_tanh_forward.1} parent=1 // pred_check_branch
      %39 = sbr.rel (0) target = $region17
    $region16: #{net_tanh_forward.1} parent=1 // pred_region
      %s41 = ssub.s32 2048, 2048
      %42 = vsyncadd [#allocation5], %s41
      %s43 = sshll.u32 [#allocation6], 4
      %s44 = int_to_ptr.vmem [resolvable:$true] %s43
      %49 = dma.hbm_to_vmem [thread:$0]  %s3, 2048, %s44, [#allocation5], 128, 128, 8
    $region17: #{net_tanh_forward.1} parent=1 // pred_fallthru
      _
    // Predicated region
    $region18: #{net_tanh_forward.1} parent=1 // pred_check
      _
    $region19: #{net_tanh_forward.1} parent=1 // pred_check_branch
      %51 = sbr.rel (0) target = $region21
    $region20: #{net_tanh_forward.1} parent=1 // pred_region
      _
    $region21: #{net_tanh_forward.1} parent=1 // pred_fallthru
      _
    // Predicated region
    $region22: #{net_tanh_forward.1} parent=1 // pred_check
      _
    $region23: #{net_tanh_forward.1} parent=1 // pred_check_branch
      %53 = sbr.rel (0) target = $region25
    $region24: #{net_tanh_forward.1} parent=1 // pred_region
      %54 = dma.done [#allocation3], 512
    $region25: #{net_tanh_forward.1} parent=1 // pred_fallthru
      _
    // Predicated region
    $region26: #{net_tanh_forward.1} parent=1 // pred_check
      _
    $region27: #{net_tanh_forward.1} parent=1 // pred_check_branch
      %56 = sbr.rel (0) target = $region29
    $region28: #{net_tanh_forward.1} parent=1 // pred_region
      %57 = dma.done [#allocation5], 1024
    $region29: #{net_tanh_forward.1} parent=1 // pred_fallthru
      _
    // Predicated region
    $region30: #{net_tanh_forward.1} parent=1 // pred_check
      _
    $region31: #{net_tanh_forward.1} parent=1 // pred_check_branch
      %59 = sbr.rel (0) target = $region33
    $region32: #{net_tanh_forward.1} parent=1 // pred_region
      %60 = dma.done [#allocation5], 2048
    $region33: #{net_tanh_forward.1} parent=1 // pred_fallthru
      _
    %v61 = vld [vmem:[#allocation2] sm:$0xff]
    %v62 = vld [vmem:[#allocation2 + $0x8] sm:$0xff]
    %v63 = vld [vmem:[#allocation2 + $0x10] sm:$0xff]
    %v64 = vld [vmem:[#allocation2 + $0x18] sm:$0xff]
    %v65 = vld [vmem:[#allocation4] sm:$0xff]
    %v66 = vld [vmem:[#allocation4 + $0x8] sm:$0xff]
    %v67 = vld [vmem:[#allocation4 + $0x10] sm:$0xff]
    %v68 = vld [vmem:[#allocation4 + $0x18] sm:$0xff]
    %v69 = vld [vmem:[#allocation4 + $0x20] sm:$0xff]
    %v70 = vld [vmem:[#allocation4 + $0x28] sm:$0xff]
    %v71 = vld [vmem:[#allocation4 + $0x30] sm:$0xff]
    %v72 = vld [vmem:[#allocation4 + $0x38] sm:$0xff]
    %v73 = vld [vmem:[%s2] sm:$0x1]
    %v75 = vlaneseq
    %v76 = vshrl.u32 %v75, 7
    %v77 = vsub.s32 0, %v76
    %v78 = vrot.slane %v73, %v77
    %vm80 = vcmask 523264
    %v82 = vsel %vm80, %v61, 0
    %v85 = vsel %vm80, %v62, 0
    %v88 = vsel %vm80, %v63, 0
    %v91 = vsel %vm80, %v64, 0
    %93 = vmatprep.subr.mxu0 0.0
    %94 = vmatpush1.msra.mxu0 %v65
    %95 = vmatprep.subr.mxu0 0.0
    %96 = vmatpush1.msra.mxu0 %v66
    %97 = vmatprep.subr.mxu0 0.0
    %98 = vmatpush1.msra.mxu0 %v67
    %99 = vmatprep.subr.mxu0 0.0
    %100 = vmatpush1.msra.mxu0 %v68
    %101 = vmatprep.subr.mxu0 0.0
    %102 = vmatpush1.msra.mxu0 %v69
    %103 = vmatprep.subr.mxu0 0.0
    %104 = vmatpush1.msra.mxu0 %v70
    %105 = vmatprep.subr.mxu0 0.0
    %106 = vmatpush1.msra.mxu0 %v71
    %107 = vmatprep.subr.mxu0 0.0
    %108 = vmatpush1.msra.mxu0 %v72
    %109 = vmatprep.subr.mxu0 0.0
    %110 = vmatpush1.msra.mxu0 0.0
    %111 = vmatprep.subr.mxu0 0.0
    %112 = vmatpush1.msra.mxu0 0.0
    %113 = vmatprep.subr.mxu0 0.0
    %114 = vmatpush1.msra.mxu0 0.0
    %115 = vmatprep.subr.mxu0 0.0
    %116 = vmatpush1.msra.mxu0 0.0
    %117 = vmatprep.subr.mxu0 0.0
    %118 = vmatpush1.msra.mxu0 0.0
    %119 = vmatprep.subr.mxu0 0.0
    %120 = vmatpush1.msra.mxu0 0.0
    %121 = vmatprep.subr.mxu0 0.0
    %122 = vmatpush1.msra.mxu0 0.0
    %123 = vmatprep.subr.mxu0 0.0
    %124 = vmatpush1.msra.mxu0 0.0
    %125 = vmatprep.subr.mxu0 0.0
    %126 = vmatpush1.msra.mxu0 0.0
    %127 = vmatprep.subr.mxu0 0.0
    %128 = vmatpush1.msra.mxu0 0.0
    %129 = vmatprep.subr.mxu0 0.0
    %130 = vmatpush1.msra.mxu0 0.0
    %131 = vmatprep.subr.mxu0 0.0
    %132 = vmatpush1.msra.mxu0 0.0
    %133 = vmatprep.subr.mxu0 0.0
    %134 = vmatpush1.msra.mxu0 0.0
    %135 = vmatprep.subr.mxu0 0.0
    %136 = vmatpush1.msra.mxu0 0.0
    %137 = vmatprep.subr.mxu0 0.0
    %138 = vmatpush1.msra.mxu0 0.0
    %139 = vmatprep.subr.mxu0 0.0
    %140 = vmatpush1.msra.mxu0 0.0
    %141 = vmatprep.subr.mxu0 0.0
    %142 = vmatpush1.msra.mxu0 0.0
    %143 = vmatprep.subr.mxu0 0.0
    %144 = vmatpush1.msra.mxu0 0.0
    %145 = vmatprep.subr.mxu0 0.0
    %146 = vmatpush1.msra.mxu0 0.0
    %147 = vmatprep.subr.mxu0 0.0
    %148 = vmatpush1.msra.mxu0 0.0
    %149 = vmatprep.subr.mxu0 0.0
    %150 = vmatpush1.msra.mxu0 0.0
    %151 = vmatprep.subr.mxu0 0.0
    %152 = vmatpush1.msra.mxu0 0.0
    %153 = vmatprep.subr.mxu0 0.0
    %154 = vmatpush1.msra.mxu0 0.0
    %155 = vmatprep.subr.mxu0 0.0
    %156 = vmatpush1.msra.mxu0 0.0
    %157 = vmatprep.mubr.f32.mxu0 0.0
    %158 = vmatmul.mubr.f32.gmra.mrb[0].mxu0 %v82
    %v159 = vpop.f32.mrb[0].mxu0
    %v160 = vadd.f32 %v78, %v159
    %v161 = vpop.f32.mrb[0].mxu0
    %162 = vmatprep.mubr.f32.mxu0 0.0
    %163 = vmatmul.mubr.f32.gmra.mrb[0].mxu0 %v85
    %v164 = vpop.f32.mrb[0].mxu0
    %v165 = vadd.f32 %v78, %v164
    %v166 = vpop.f32.mrb[0].mxu0
    %167 = vmatprep.mubr.f32.mxu0 0.0
    %168 = vmatmul.mubr.f32.gmra.mrb[0].mxu0 %v88
    %v169 = vpop.f32.mrb[0].mxu0
    %v170 = vadd.f32 %v78, %v169
    %v171 = vpop.f32.mrb[0].mxu0
    %172 = vmatprep.mubr.f32.mxu0 0.0
    %173 = vmatmul.mubr.f32.gmra.mrb[0].mxu0 %v91
    %v174 = vpop.f32.mrb[0].mxu0
    %v175 = vadd.f32 %v78, %v174
    %v176 = vpop.f32.mrb[0].mxu0
    %177 = vdwg.mxu0
    %v178 = vtanh.pop %v160
    %v179 = vtanh.pop %v165
    %v180 = vtanh.pop %v170
    %v181 = vtanh.pop %v175
    %v182 = vld [vmem:[#allocation6] sm:$0xff]
    %v183 = vld [vmem:[#allocation6 + $0x8] sm:$0xff]
    %v184 = vld [vmem:[#allocation6 + $0x10] sm:$0xff]
    %v185 = vld [vmem:[#allocation6 + $0x18] sm:$0xff]
    %v186 = vld [vmem:[#allocation6 + $0x20] sm:$0xff]
    %v187 = vld [vmem:[#allocation6 + $0x28] sm:$0xff]
    %v188 = vld [vmem:[#allocation6 + $0x30] sm:$0xff]
    %v189 = vld [vmem:[#allocation6 + $0x38] sm:$0xff]
    %v190 = vld [vmem:[#allocation6 + $0x40] sm:$0xff]
    %v191 = vld [vmem:[#allocation6 + $0x48] sm:$0xff]
    %v192 = vld [vmem:[#allocation6 + $0x50] sm:$0xff]
    %v193 = vld [vmem:[#allocation6 + $0x58] sm:$0xff]
    %v194 = vld [vmem:[#allocation6 + $0x60] sm:$0xff]
    %v195 = vld [vmem:[#allocation6 + $0x68] sm:$0xff]
    %v196 = vld [vmem:[#allocation6 + $0x70] sm:$0xff]
    %v197 = vld [vmem:[#allocation6 + $0x78] sm:$0xff]
    %v198 = vld [vmem:[%s4] sm:$0x1]
    %v200 = vlaneseq
    %v201 = vshrl.u32 %v200, 7
    %v202 = vsub.s32 0, %v201
    %v203 = vrot.slane %v198, %v202
    %205 = vmatprep.subr.mxu0 0.0
    %206 = vmatpush1.msra.mxu0 %v182
    %207 = vmatprep.subr.mxu0 0.0
    %208 = vmatpush1.msra.mxu0 %v183
    %209 = vmatprep.subr.mxu0 0.0
    %210 = vmatpush1.msra.mxu0 %v184
    %211 = vmatprep.subr.mxu0 0.0
    %212 = vmatpush1.msra.mxu0 %v185
    %213 = vmatprep.subr.mxu0 0.0
    %214 = vmatpush1.msra.mxu0 %v186
    %215 = vmatprep.subr.mxu0 0.0
    %216 = vmatpush1.msra.mxu0 %v187
    %217 = vmatprep.subr.mxu0 0.0
    %218 = vmatpush1.msra.mxu0 %v188
    %219 = vmatprep.subr.mxu0 0.0
    %220 = vmatpush1.msra.mxu0 %v189
    %221 = vmatprep.subr.mxu0 0.0
    %222 = vmatpush1.msra.mxu0 %v190
    %223 = vmatprep.subr.mxu0 0.0
    %224 = vmatpush1.msra.mxu0 %v191
    %225 = vmatprep.subr.mxu0 0.0
    %226 = vmatpush1.msra.mxu0 %v192
    %227 = vmatprep.subr.mxu0 0.0
    %228 = vmatpush1.msra.mxu0 %v193
    %229 = vmatprep.subr.mxu0 0.0
    %230 = vmatpush1.msra.mxu0 %v194
    %231 = vmatprep.subr.mxu0 0.0
    %232 = vmatpush1.msra.mxu0 %v195
    %233 = vmatprep.subr.mxu0 0.0
    %234 = vmatpush1.msra.mxu0 %v196
    %235 = vmatprep.subr.mxu0 0.0
    %236 = vmatpush1.msra.mxu0 %v197
    %237 = vmatprep.subr.mxu0 0.0
    %238 = vmatpush1.msra.mxu0 0.0
    %239 = vmatprep.subr.mxu0 0.0
    %240 = vmatpush1.msra.mxu0 0.0
    %241 = vmatprep.subr.mxu0 0.0
    %242 = vmatpush1.msra.mxu0 0.0
    %243 = vmatprep.subr.mxu0 0.0
    %244 = vmatpush1.msra.mxu0 0.0
    %245 = vmatprep.subr.mxu0 0.0
    %246 = vmatpush1.msra.mxu0 0.0
    %247 = vmatprep.subr.mxu0 0.0
    %248 = vmatpush1.msra.mxu0 0.0
    %249 = vmatprep.subr.mxu0 0.0
    %250 = vmatpush1.msra.mxu0 0.0
    %251 = vmatprep.subr.mxu0 0.0
    %252 = vmatpush1.msra.mxu0 0.0
    %253 = vmatprep.subr.mxu0 0.0
    %254 = vmatpush1.msra.mxu0 0.0
    %255 = vmatprep.subr.mxu0 0.0
    %256 = vmatpush1.msra.mxu0 0.0
    %257 = vmatprep.subr.mxu0 0.0
    %258 = vmatpush1.msra.mxu0 0.0
    %259 = vmatprep.subr.mxu0 0.0
    %260 = vmatpush1.msra.mxu0 0.0
    %261 = vmatprep.subr.mxu0 0.0
    %262 = vmatpush1.msra.mxu0 0.0
    %263 = vmatprep.subr.mxu0 0.0
    %264 = vmatpush1.msra.mxu0 0.0
    %265 = vmatprep.subr.mxu0 0.0
    %266 = vmatpush1.msra.mxu0 0.0
    %267 = vmatprep.subr.mxu0 0.0
    %268 = vmatpush1.msra.mxu0 0.0
    %269 = vmatprep.mubr.f32.mxu0 0.0
    %270 = vmatmul.mubr.f32.gmra.mrb[0].mxu0 %v178
    %v271 = vpop.f32.mrb[0].mxu0
    %v272 = vadd.f32 %v203, %v271
    %v273 = vpop.f32.mrb[0].mxu0
    %274 = vmatprep.mubr.f32.mxu0 0.0
    %275 = vmatmul.mubr.f32.gmra.mrb[0].mxu0 %v179
    %v276 = vpop.f32.mrb[0].mxu0
    %v277 = vadd.f32 %v203, %v276
    %v278 = vpop.f32.mrb[0].mxu0
    %279 = vmatprep.mubr.f32.mxu0 0.0
    %280 = vmatmul.mubr.f32.gmra.mrb[0].mxu0 %v180
    %v281 = vpop.f32.mrb[0].mxu0
    %v282 = vadd.f32 %v203, %v281
    %v283 = vpop.f32.mrb[0].mxu0
    %284 = vmatprep.mubr.f32.mxu0 0.0
    %285 = vmatmul.mubr.f32.gmra.mrb[0].mxu0 %v181
    %v286 = vpop.f32.mrb[0].mxu0
    %v287 = vadd.f32 %v203, %v286
    %v288 = vpop.f32.mrb[0].mxu0
    %289 = vdwg.mxu0
    %290 = vst [vmem:[%s5] sm:$0xff] %v272
    %291 = vst [vmem:[%s5 + $0x8] sm:$0xff] %v277
    %292 = vst [vmem:[%s5 + $0x10] sm:$0xff] %v282
    %293 = vst [vmem:[%s5 + $0x18] sm:$0xff] %v287
    // Predicated region
    $region34: #{net_tanh_forward.1} parent=1 // pred_check
      _
    $region35: #{net_tanh_forward.1} parent=1 // pred_check_branch
      %295 = sbr.rel (0) target = $region37
    $region36: #{net_tanh_forward.1} parent=1 // pred_region
      _
    $region37: #{net_tanh_forward.1} parent=1 // pred_fallthru
      _
    // Predicated region
    $region38: #{net_tanh_forward.1} parent=1 // pred_check
      _
    $region39: #{net_tanh_forward.1} parent=1 // pred_check_branch
      %297 = sbr.rel (0) target = $region41
    $region40: #{net_tanh_forward.1} parent=1 // pred_region
      _
    $region41: #{net_tanh_forward.1} parent=1 // pred_fallthru
      _
    %298 = vsyncpa [#allocation3], 1
    %299 = vsyncpa [#allocation5], 1

</llo_original>
